<compile_context>
chip_gen: v6e
topology: v6e:2x2x1
jax: 0.10.0
libtpu: 0.0.40
codegen_flags: <defaults>
</compile_context>

<pallas_src>
import jax
import jax.numpy as jnp
from jax.experimental import pallas as pl
from jax.experimental.pallas import tpu as pltpu

_VMEM_LIMIT_BYTES = 48 * 1024 * 1024   # safe on v7x (64 MiB phys), generous on v5e/v6e
_FUSED_SLAB_BYTES = 8 * 1024 * 1024    # per-image (C, HWp) cap for the fused path


def _fused_kernel(x_ref, wt_ref, b_ref, o_ref):
    # x_ref: (1, C, HWp) in input dtype; wt_ref: (C, C) f32 = (weight / HW).T
    # (c_in-major); b_ref: (1, C) f32; o_ref: (1, C, HWp) in input dtype.
    x = x_ref[...]
    sums = jnp.sum(x, axis=-1, dtype=jnp.float32)                      # (1, C) f32
    attn = jnp.dot(sums, wt_ref[...],
                   preferred_element_type=jnp.float32) + b_ref[...]    # (1, C) f32
    # Multiply in the input dtype (attn down-cast per channel).  For bf16 inputs
    # this rounds the per-channel scale before the product -- a deliberate,
    # negligible precision trade that avoids materializing a full f32 copy of
    # the tile in VMEM.  For f32 inputs it is exact.
    o_ref[...] = x * attn.astype(x.dtype)[:, :, None]


def _pool_sum_kernel(x_ref, sum_ref):
    # x_ref: (1, C, T) in input dtype; sum_ref: (1, 1, C, 1) f32, VMEM-resident
    # across the innermost (reduction) grid axis.
    @pl.when(pl.program_id(2) == 0)
    def _():
        sum_ref[...] = jnp.zeros_like(sum_ref)

    sum_ref[...] += jnp.sum(x_ref[...], axis=-1, keepdims=True,
                            dtype=jnp.float32)[:, None]


def _scale_kernel(attn_ref, x_ref, o_ref):
    # attn_ref: (1, C, 1) f32; x_ref / o_ref: (1, C, T) in input dtype.
    o_ref[...] = x_ref[...] * attn_ref[...].astype(x_ref.dtype)


def _round_up(v, m):
    return ((v + m - 1) // m) * m


def _pick_spatial_tile(hw, c, itemsize, vmem_limit_bytes, max_tile=None):
    """VMEM-budget-aware, lane-dense (multiple-of-128) spatial tile."""
    # Pass 2 keeps ~4 live (1, C, T) buffers (2 double-buffered inputs +
    # 2 double-buffered outputs); leave ~half the limit as headroom.
    budget = vmem_limit_bytes // 2
    t = budget // (4 * c * itemsize)
    if max_tile is not None:
        t = min(t, max_tile)
    t = max((t // 128) * 128, 128)
    return min(t, _round_up(hw, 128))


def _maybe_pad_spatial(x_flat, hwp):
    hw = x_flat.shape[-1]
    if hwp == hw:
        return x_flat
    # Zero pad: zeros do not perturb the spatial sums; the pad is sliced off
    # the output.  Keeps the output last dim lane-dense (unmasked vst).
    return jnp.pad(x_flat, ((0, 0), (0, 0), (0, hwp - hw)))


def simplified_channel_attention(x_nchw, weight, bias, *,
                                 vmem_limit_bytes=_VMEM_LIMIT_BYTES,
                                 fused_slab_bytes=_FUSED_SLAB_BYTES,
                                 max_tile=None):
    """NAFNet SimplifiedChannelAttention forward.

    x_nchw: (N, C, H, W).
    weight: Conv2d(C, C, 1) weight, either squeezed (C, C) or raw
            (C, C, 1, 1), with PyTorch's [c_out, c_in] convention.
    bias:   (C,).
    """
    N, C, H, W = x_nchw.shape
    HW = H * W
    in_dtype = x_nchw.dtype
    itemsize = x_nchw.dtype.itemsize

    weight = jnp.asarray(weight)
    if weight.ndim == 4:                       # raw Conv2d weight (C_out, C_in, 1, 1)
        weight = weight[:, :, 0, 0]
    assert weight.shape == (C, C), "weight must be (C, C) with [c_out, c_in] layout"
    assert bias.shape == (C,)

    x_flat = x_nchw.reshape(N, C, HW)
    # Fold the 1/HW (mean) into the transposed weight so every path only ever
    # needs spatial SUMS:  attn = sums @ wt + b,  wt[c_in, c_out] = W[c_out, c_in]/HW.
    wt = (weight.astype(jnp.float32) * (1.0 / HW)).T            # (C, C) f32
    b_row = bias.astype(jnp.float32).reshape(1, C)               # (1, C) f32

    # ---------------- fused single-read path ----------------
    hwp_fused = _round_up(HW, 128)
    slab = C * hwp_fused * itemsize
    fused_vmem = 4 * slab + C * C * 4 + C * 4        # 2 in + 2 out bufs + W + b
    if slab <= fused_slab_bytes and fused_vmem <= (3 * vmem_limit_bytes) // 4:
        xp = _maybe_pad_spatial(x_flat, hwp_fused)
        out = pl.pallas_call(
            _fused_kernel,
            out_shape=jax.ShapeDtypeStruct((N, C, hwp_fused), in_dtype),
            grid=(N,),
            in_specs=[
                pl.BlockSpec((1, C, hwp_fused), lambda n: (n, 0, 0)),
                pl.BlockSpec((C, C), lambda n: (0, 0)),
                pl.BlockSpec((1, C), lambda n: (0, 0)),
            ],
            out_specs=pl.BlockSpec((1, C, hwp_fused), lambda n: (n, 0, 0)),
            compiler_params=pltpu.CompilerParams(
                dimension_semantics=("parallel",),
                vmem_limit_bytes=vmem_limit_bytes),
            cost_estimate=pl.CostEstimate(
                flops=int(2 * N * C * HW + 2 * N * C * C),
                transcendentals=0,
                bytes_accessed=int(2 * N * slab + C * C * 4 + C * 4)),
        )(xp, wt, b_row)
        return out[:, :, :HW].reshape(N, C, H, W)

    # ---------------- two-pass fallback (slab too large for VMEM) ----------------
    T = _pick_spatial_tile(HW, C, itemsize, vmem_limit_bytes, max_tile)
    hwp = _round_up(HW, T)
    num_t = hwp // T
    xp = _maybe_pad_spatial(x_flat, hwp)

    # v7x megacore: extra *parallel* spatial split so both TensorCores cover the
    # dominant read of x even at N=1; partial sums combined in the wrapper.
    S = 2 if (num_t % 2 == 0 and num_t >= 2) else 1
    tiles_per_split = num_t // S

    partial = pl.pallas_call(
        _pool_sum_kernel,
        out_shape=jax.ShapeDtypeStruct((N, S, C, 1), jnp.float32),
        grid=(N, S, tiles_per_split),
        in_specs=[pl.BlockSpec(
            (1, C, T), lambda n, s, t: (n, 0, s * tiles_per_split + t))],
        out_specs=pl.BlockSpec((1, 1, C, 1), lambda n, s, t: (n, s, 0, 0)),
        compiler_params=pltpu.CompilerParams(
            dimension_semantics=("parallel", "parallel", "arbitrary"),
            vmem_limit_bytes=vmem_limit_bytes),
        cost_estimate=pl.CostEstimate(
            flops=int(N * C * HW),
            transcendentals=0,
            bytes_accessed=int(N * C * hwp * itemsize + N * S * C * 4)),
    )(xp)
    sums = partial.sum(axis=1)                                   # (N, C, 1) f32

    # attn = mean(x) @ W.T + b  -- tiny batched matmul, stays in XLA.
    attn = (sums[:, :, 0] @ wt + b_row)[:, :, None]              # (N, C, 1) f32

    out_flat = pl.pallas_call(
        _scale_kernel,
        out_shape=jax.ShapeDtypeStruct((N, C, hwp), in_dtype),
        grid=(N, num_t),
        in_specs=[
            pl.BlockSpec((1, C, 1), lambda n, t: (n, 0, 0)),
            pl.BlockSpec((1, C, T), lambda n, t: (n, 0, t)),
        ],
        out_specs=pl.BlockSpec((1, C, T), lambda n, t: (n, 0, t)),
        compiler_params=pltpu.CompilerParams(
            dimension_semantics=("parallel", "parallel"),
            vmem_limit_bytes=vmem_limit_bytes),
        cost_estimate=pl.CostEstimate(
            flops=int(N * C * HW),
            transcendentals=0,
            bytes_accessed=int(2 * N * C * hwp * itemsize + N * C * 4)),
    )(attn, xp)
    return out_flat[:, :, :HW].reshape(N, C, H, W)


def _reference(x_nchw, weight, bias):
    pool = jnp.mean(x_nchw.astype(jnp.float32), axis=(2, 3))                 # (N, C)
    attn = pool @ weight.astype(jnp.float32).T + bias.astype(jnp.float32)    # (N, C)
    return (attn[:, :, None, None] * x_nchw.astype(jnp.float32)).astype(x_nchw.dtype)


if __name__ == "__main__":
    key = jax.random.PRNGKey(0)
    kx, kw, kb, kx2 = jax.random.split(key, 4)

    N, C = 2, 4
    bound = 1.0 / (C ** 0.5)
    # Raw Conv2d(C, C, 1) weight layout (C_out, C_in, 1, 1); wrapper squeezes it.
    weight4d = jax.random.uniform(kw, (C, C, 1, 1), minval=-bound, maxval=bound,
                                  dtype=jnp.float32)
    weight = weight4d[:, :, 0, 0]
    bias = jax.random.uniform(kb, (C,), minval=-bound, maxval=bound,
                              dtype=jnp.float32)

    # 1) Fused single-read path (per-image slab easily fits VMEM).
    x = jax.random.normal(kx, (N, C, 16, 16), dtype=jnp.float32)
    out = jax.block_until_ready(simplified_channel_attention(x, weight4d, bias))
    assert jnp.allclose(out, _reference(x, weight, bias), atol=1e-5, rtol=1e-5), \
        "mismatch (fused)"

    # 2) Two-pass fallback with multi-tile reduction + parallel spatial split
    #    (HW=512, T=128 -> num_t=4, S=2, two reduction steps per split).
    x2 = jax.random.normal(kx2, (N, C, 16, 32), dtype=jnp.float32)
    out2 = jax.block_until_ready(simplified_channel_attention(
        x2, weight4d, bias, fused_slab_bytes=0, max_tile=128))
    assert jnp.allclose(out2, _reference(x2, weight, bias), atol=1e-5, rtol=1e-5), \
        "mismatch (two-pass tiled)"

    # 3) Non-128-multiple spatial size -> zero-padding path (fused).
    x3 = jax.random.normal(kx, (N, C, 10, 12), dtype=jnp.float32)
    out3 = jax.block_until_ready(simplified_channel_attention(x3, weight4d, bias))
    assert jnp.allclose(out3, _reference(x3, weight, bias), atol=1e-5, rtol=1e-5), \
        "mismatch (padded fused)"

    # 4) Non-128-multiple spatial size through the two-pass path.
    out4 = jax.block_until_ready(simplified_channel_attention(
        x3, weight4d, bias, fused_slab_bytes=0))
    assert jnp.allclose(out4, _reference(x3, weight, bias), atol=1e-5, rtol=1e-5), \
        "mismatch (padded two-pass)"

    print("KERNEL_OK")
</pallas_src>

<mosaic_0001>
module attributes {stable_mosaic.version = 11 : i64} {
  func.func @_fused_kernel(%arg0: i32, %arg1: memref<1x4x256xf32, #tpu.memory_space<vmem>>, %arg2: memref<4x4xf32, #tpu.memory_space<vmem>>, %arg3: memref<1x4xf32, #tpu.memory_space<vmem>>, %arg4: memref<1x4x256xf32, #tpu.memory_space<vmem>>) attributes {dimension_semantics = [#tpu.dimension_semantics<parallel>], iteration_bounds = array<i64: 2>, scalar_prefetch = 0 : i64, scratch_operands = 0 : i64, tpu.core_type = #tpu.core_type<tc>, window_params = [{transform_indices = @transform_0, window_bounds = array<i64: 1, 4, 256>}, {pipeline_mode = #tpu.pipeline_mode<synchronous>, transform_indices = @transform_1, window_bounds = array<i64: 4, 4>}, {pipeline_mode = #tpu.pipeline_mode<synchronous>, transform_indices = @transform_2, window_bounds = array<i64: 1, 4>}, {transform_indices = @transform_3, window_bounds = array<i64: 1, 4, 256>}]} {
    %c0 = arith.constant 0 : index
    %c0_0 = arith.constant 0 : index
    %c0_1 = arith.constant 0 : index
    %0 = vector.load %arg1[%c0, %c0_0, %c0_1] : memref<1x4x256xf32, #tpu.memory_space<vmem>>, vector<1x4x256xf32>
    %cst = arith.constant dense<0.000000e+00> : vector<1x4xf32>
    %1 = vector.multi_reduction <add>, %0, %cst [2] : vector<1x4x256xf32> to vector<1x4xf32>
    %c0_2 = arith.constant 0 : index
    %c0_3 = arith.constant 0 : index
    %2 = vector.load %arg2[%c0_2, %c0_3] : memref<4x4xf32, #tpu.memory_space<vmem>>, vector<4x4xf32>
    %cst_4 = arith.constant dense<0.000000e+00> : vector<1x4xf32>
    %3 = tpu.matmul %1, %2, %cst_4 {dimension_numbers = #tpu.dot_dimension_numbers<[1], [0], [0], [1], [0, 0, 1, 1], [], []>} : vector<1x4xf32>, vector<4x4xf32>, vector<1x4xf32> -> vector<1x4xf32>
    %c0_5 = arith.constant 0 : index
    %c0_6 = arith.constant 0 : index
    %4 = vector.load %arg3[%c0_5, %c0_6] : memref<1x4xf32, #tpu.memory_space<vmem>>, vector<1x4xf32>
    %5 = arith.addf %3, %4 : vector<1x4xf32>
    %6 = vector.shape_cast %5 : vector<1x4xf32> to vector<1x4x1xf32>
    %7 = vector.broadcast %6 : vector<1x4x1xf32> to vector<1x4x256xf32>
    %8 = arith.mulf %0, %7 : vector<1x4x256xf32>
    %c0_7 = arith.constant 0 : index
    %c0_8 = arith.constant 0 : index
    %c0_9 = arith.constant 0 : index
    %9 = vector.load %arg4[%c0_7, %c0_8, %c0_9] : memref<1x4x256xf32, #tpu.memory_space<vmem>>, vector<1x4x256xf32>
    tpu.vector_store %arg4[%c0_7, %c0_8, %c0_9], %8 {strides = array<i32>} : memref<1x4x256xf32, #tpu.memory_space<vmem>>, vector<1x4x256xf32>,
    return
  }
  func.func @transform_0(%arg0: i32) -> (i32, i32, i32) {
    %c0_i32 = arith.constant 0 : i32
    %c0_i32_0 = arith.constant 0 : i32
    %c0_i32_1 = arith.constant 0 : i32
    return %arg0, %c0_i32, %c0_i32_0 : i32, i32, i32
  }
  func.func @transform_1(%arg0: i32) -> (i32, i32) {
    %c0_i32 = arith.constant 0 : i32
    %c0_i32_0 = arith.constant 0 : i32
    %c0_i32_1 = arith.constant 0 : i32
    return %c0_i32, %c0_i32_0 : i32, i32
  }
  func.func @transform_2(%arg0: i32) -> (i32, i32) {
    %c0_i32 = arith.constant 0 : i32
    %c0_i32_0 = arith.constant 0 : i32
    %c0_i32_1 = arith.constant 0 : i32
    return %c0_i32, %c0_i32_0 : i32, i32
  }
  func.func @transform_3(%arg0: i32) -> (i32, i32, i32) {
    %c0_i32 = arith.constant 0 : i32
    %c0_i32_0 = arith.constant 0 : i32
    %c0_i32_1 = arith.constant 0 : i32
    return %arg0, %c0_i32, %c0_i32_0 : i32, i32, i32
  }
}

</mosaic_0001>

<llo_original>
// kernel: tpu_custom_call.1
$region0: #{tpu_custom_call.1}
  #allocation0 [shape = 'u32[]', space=smem, size = 0x4, offset = 0x4, fixed_abs, tag = 'smem constant byte address 0x4 - core index']
  #allocation1 [shape = 'u32[144,128]{1,0:T(1,128)}', space=vmem, size = 0x12000, scoped, tag = 'internal scratch']
  %s0 = inlined_call_operand.hbm [shape: f32[2,4,256], index: 0, kind: input, shape index: {}]
  %s1 = inlined_call_operand.hbm [shape: f32[4,4], index: 1, kind: input, shape index: {}]
  %s2 = inlined_call_operand.vmem [shape: f32[1,4], index: 2, kind: input, shape index: {}]
  %s3 = inlined_call_operand.hbm [shape: f32[2,4,256], index: 3, kind: output, shape index: {}]
  %s4 = sld [smem:[#allocation0]]
  $region53: #{tpu_custom_call.1} parent=0
    _
  %s6 = ssub.s32 1, %s4
  %s7 = scalar_select 0, %s6, %s4
  $region1: #{tpu_custom_call.1} parent=0
    #allocation2 [shape = 'u8[8192]{0}', space=vmem, size = 0x2000, scoped, tag = 'input window, operand 0']
    #allocation3 [shape = 's32[2]{0}', space=sflag, size = 0x8, scoped, tag = 'scoped memory for tpu_custom_call.1']
    #allocation4 [shape = 's32[2]{0}', space=sflag, size = 0x8, scoped, tag = 'scoped memory for tpu_custom_call.1']
    #allocation5 [shape = 'u8[2048]{0}', space=vmem, size = 0x800, scoped, tag = 'input window, operand 1, single buffered']
    #allocation6 [shape = 's32[1]{0}', space=sflag, size = 0x4, scoped, tag = 'scoped memory for tpu_custom_call.1']
    #allocation7 [shape = 'u8[8192]{0}', space=vmem, size = 0x2000, scoped, tag = 'output window, operand 0']
    %8 = vsyncpa [#allocation3], 0
    %s9 = scalar_lea.sflag [#allocation3], 1
    %10 = vsyncpa %s9, 0
    %11 = vsyncpa [#allocation6], 0
    %12 = vsyncpa [#allocation4], 0
    %s13 = scalar_lea.sflag [#allocation4], 1
    %14 = vsyncpa %s13, 0
    loop: start=0, step=1, limit=4
    $region2: #{tpu_custom_call.1} parent=1 // loop_pre_header
      _
    $region3: #{tpu_custom_call.1} parent=1 // loop_header
      %s16 = sphi 0, %s20
      %p17 = scmp.ge.s32.totalorder %s16, 4
      %s26 = sphi 0, %s28
      %s29 = sphi 0, %s26
      %s30 = sphi 0, %s29
      %s46 = sphi 0, %s30
      %s50 = sphi 0, %s50
      %s52 = sphi 0, %s50
      %s53 = sphi 0, %s52
      %s67 = sphi 0, %s53
      %s71 = sphi 0, %s71
      %s73 = sphi 0, %s71
      %s74 = sphi 0, %s73
      %s88 = sphi 0, %s74
      %s94 = sphi 0, %s96
      %s97 = sphi 0, %s94
      %s98 = sphi 0, %s97
      %s114 = sphi 0, %s98
    $region4: #{tpu_custom_call.1} parent=1 // loop_header_branch
      %19 = sbr.rel (%p17) target = $region8
    $region5: #{tpu_custom_call.1} parent=1 // loop_body
      %s21 = ssub.s32 %s16, 1
      %s22 = ssub.s32 %s16, 2
      %s23 = sadd.s32 %s16, 1
      %s24 = ssub.s32 %s16, %s23
      %p25 = scmp.eq.s32.totalorder %s24, 0
      %s27 = sadd.s32 %s26, 1
      %s28 = scalar_select %p25, %s26, %s27
      %p31 = pneg %p25
      %p32 = scmp.eq.s32.totalorder %s16, 1
      %p33 = por %p31, %p32
      %p34 = scmp.ne.s32.totalorder %s26, %s29
      %p35 = scmp.eq.s32.totalorder %s16, 0
      %p36 = por %p34, %p35
      %p37 = scmp.ne.s32.totalorder %s26, %s29
      %p38 = scmp.eq.s32.totalorder %s21, 1
      %p39 = por %p37, %p38
      %p40 = scmp.ne.s32.totalorder %s29, %s30
      %p41 = scmp.eq.s32.totalorder %s21, 0
      %p42 = por %p40, %p41
      %p43 = scmp.ne.s32.totalorder %s29, %s30
      %p44 = scmp.eq.s32.totalorder %s22, 1
      %p45 = por %p43, %p44
      %p47 = scmp.ne.s32.totalorder %s30, %s46
      %p48 = scmp.eq.s32.totalorder %s22, 0
      %p49 = por %p47, %p48
      %s51 = sadd.s32 %s50, 1
      %p54 = scmp.eq.s32.totalorder %s16, 1
      %p55 = scmp.ne.s32.totalorder %s50, %s52
      %p56 = scmp.eq.s32.totalorder %s16, 0
      %p57 = por %p55, %p56
      %p58 = scmp.ne.s32.totalorder %s50, %s52
      %p59 = scmp.eq.s32.totalorder %s21, 1
      %p60 = por %p58, %p59
      %p61 = scmp.ne.s32.totalorder %s52, %s53
      %p62 = scmp.eq.s32.totalorder %s21, 0
      %p63 = por %p61, %p62
      %p64 = scmp.ne.s32.totalorder %s52, %s53
      %p65 = scmp.eq.s32.totalorder %s22, 1
      %p66 = por %p64, %p65
      %p68 = scmp.ne.s32.totalorder %s53, %s67
      %p69 = scmp.eq.s32.totalorder %s22, 0
      %p70 = por %p68, %p69
      %s72 = sadd.s32 %s71, 1
      %p75 = scmp.eq.s32.totalorder %s16, 1
      %p76 = scmp.ne.s32.totalorder %s71, %s73
      %p77 = scmp.eq.s32.totalorder %s16, 0
      %p78 = por %p76, %p77
      %p79 = scmp.ne.s32.totalorder %s71, %s73
      %p80 = scmp.eq.s32.totalorder %s21, 1
      %p81 = por %p79, %p80
      %p82 = scmp.ne.s32.totalorder %s73, %s74
      %p83 = scmp.eq.s32.totalorder %s21, 0
      %p84 = por %p82, %p83
      %p85 = scmp.ne.s32.totalorder %s73, %s74
      %p86 = scmp.eq.s32.totalorder %s22, 1
      %p87 = por %p85, %p86
      %p89 = scmp.ne.s32.totalorder %s74, %s88
      %p90 = scmp.eq.s32.totalorder %s22, 0
      %p91 = por %p89, %p90
      %s92 = ssub.s32 %s16, %s23
      %p93 = scmp.eq.s32.totalorder %s92, 0
      %s95 = sadd.s32 %s94, 1
      %s96 = scalar_select %p93, %s94, %s95
      %p99 = pneg %p93
      %p100 = scmp.eq.s32.totalorder %s16, 1
      %p101 = por %p99, %p100
      %p102 = scmp.ne.s32.totalorder %s94, %s97
      %p103 = scmp.eq.s32.totalorder %s16, 0
      %p104 = por %p102, %p103
      %p105 = scmp.ne.s32.totalorder %s94, %s97
      %p106 = scmp.eq.s32.totalorder %s21, 1
      %p107 = por %p105, %p106
      %p108 = scmp.ne.s32.totalorder %s97, %s98
      %p109 = scmp.eq.s32.totalorder %s21, 0
      %p110 = por %p108, %p109
      %p111 = scmp.ne.s32.totalorder %s97, %s98
      %p112 = scmp.eq.s32.totalorder %s22, 1
      %p113 = por %p111, %p112
      %p115 = scmp.ne.s32.totalorder %s98, %s114
      %p116 = scmp.eq.s32.totalorder %s22, 0
      %p117 = por %p115, %p116
      %p118 = scmp.le.s32.totalorder 1, %s16
      %p119 = scmp.lt.s32.totalorder %s16, 3
      %p120 = pnand %p118, %p119
      %p121 = pneg %p120
      // Predicated region
      $region9: #{tpu_custom_call.1} parent=5 // pred_check
        _
      $region10: #{tpu_custom_call.1} parent=5 // pred_check_branch
        %123 = sbr.rel (%p120) target = $region12
      $region11: #{tpu_custom_call.1} parent=5 // pred_region
        %s124 = ssub.s32 %s16, 1
        // Predicated region
        $region13: #{tpu_custom_call.1} parent=11 // pred_check
          %p125 = pneg %p63
        $region14: #{tpu_custom_call.1} parent=11 // pred_check_branch
          %127 = sbr.rel (%p125) target = $region16
        $region15: #{tpu_custom_call.1} parent=11 // pred_region
          %s129 = ssub.s32 64, 64
          %130 = vsyncadd [#allocation6], %s129
          %s132 = sshll.u32 [#allocation5], 4
          %s133 = int_to_ptr.vmem [resolvable:$true] %s132
          %135 = dma.hbm_to_vmem [thread:$0]  %s1, 64, %s133, [#allocation6]
        $region16: #{tpu_custom_call.1} parent=11 // pred_fallthru
          _
        // Predicated region
        $region17: #{tpu_custom_call.1} parent=11 // pred_check
          %p136 = pneg %p84
        $region18: #{tpu_custom_call.1} parent=11 // pred_check_branch
          %138 = sbr.rel (%p136) target = $region20
        $region19: #{tpu_custom_call.1} parent=11 // pred_region
          _
        $region20: #{tpu_custom_call.1} parent=11 // pred_fallthru
          _
      $region12: #{tpu_custom_call.1} parent=5 // pred_fallthru
        _
      %p139 = scmp.lt.s32.totalorder %s16, 2
      // Predicated region
      $region21: #{tpu_custom_call.1} parent=5 // pred_check
        %p140 = pneg %p139
      $region22: #{tpu_custom_call.1} parent=5 // pred_check_branch
        %142 = sbr.rel (%p140) target = $region24
      $region23: #{tpu_custom_call.1} parent=5 // pred_region
        // Predicated region
        $region25: #{tpu_custom_call.1} parent=23 // pred_check
          %p143 = pneg %p36
        $region26: #{tpu_custom_call.1} parent=23 // pred_check_branch
          %145 = sbr.rel (%p143) target = $region28
        $region27: #{tpu_custom_call.1} parent=23 // pred_region
          %s146 = sand.u32 %s26, 1
          %s147 = scalar_lea.sflag [#allocation3], %s146
          %s148 = sand.u32 %s26, 1
          %s149 = smul.addr %s148, 8
          %s150 = scalar_lea.vmem [#allocation2], %s149
          %s152 = ssub.s32 128, 128
          %153 = vsyncadd %s147, %s152
          %s154 = smul.addr %s16, 2
          %s155 = smul.addr %s154, 64
          %s156 = scalar_lea.hbm %s0, %s155
          %s158 = sshll.u32 %s150, 4
          %s159 = int_to_ptr.vmem [resolvable:$true] %s158
          %161 = dma.hbm_to_vmem [thread:$0]  %s156, 128, %s159, %s147
        $region28: #{tpu_custom_call.1} parent=23 // pred_fallthru
          _
      $region24: #{tpu_custom_call.1} parent=5 // pred_fallthru
        _
      %p162 = scmp.le.s32.totalorder 1, %s16
      %p163 = scmp.lt.s32.totalorder %s16, 3
      %p164 = pnand %p162, %p163
      %p165 = pneg %p164
      // Predicated region
      $region29: #{tpu_custom_call.1} parent=5 // pred_check
        _
      $region30: #{tpu_custom_call.1} parent=5 // pred_check_branch
        %167 = sbr.rel (%p164) target = $region32
      $region31: #{tpu_custom_call.1} parent=5 // pred_region
        %s168 = ssub.s32 %s16, 1
        %s169 = sand.u32 %s29, 1
        %s170 = scalar_lea.sflag [#allocation3], %s169
        %s171 = sand.u32 %s29, 1
        %s172 = smul.addr %s171, 8
        %s173 = scalar_lea.vmem [#allocation2], %s172
        // Predicated region
        $region33: #{tpu_custom_call.1} parent=31 // pred_check
          %p174 = pneg %p42
        $region34: #{tpu_custom_call.1} parent=31 // pred_check_branch
          %176 = sbr.rel (%p174) target = $region36
        $region35: #{tpu_custom_call.1} parent=31 // pred_region
          %177 = dma.done %s170, 128
        $region36: #{tpu_custom_call.1} parent=31 // pred_fallthru
          _
        // Predicated region
        $region37: #{tpu_custom_call.1} parent=31 // pred_check
          %p178 = pneg %p63
        $region38: #{tpu_custom_call.1} parent=31 // pred_check_branch
          %180 = sbr.rel (%p178) target = $region40
        $region39: #{tpu_custom_call.1} parent=31 // pred_region
          %181 = dma.done [#allocation6], 64
        $region40: #{tpu_custom_call.1} parent=31 // pred_fallthru
          _
        %s182 = sand.u32 %s29, 1
        %s183 = scalar_lea.sflag [#allocation3], %s182
        %s184 = sand.u32 %s29, 1
        %s185 = smul.addr %s184, 8
        %s186 = scalar_lea.vmem [#allocation2], %s185
        %p187 = pneg %p42
        %p188 = pneg %p39
        %p189 = pneg %p63
        %p190 = pneg %p60
        %p191 = pneg %p84
        %p192 = pneg %p81
        %p193 = pneg %p110
        %p194 = pneg %p107
        %s195 = sand.u32 %s97, 1
        %s196 = scalar_lea.sflag [#allocation4], %s195
        %s197 = sand.u32 %s97, 1
        %s198 = smul.addr %s197, 8
        %s199 = scalar_lea.vmem [#allocation7], %s198
        %v200 = vld [vmem:[%s173] sm:$0xff]
        %v202 = vcombine.high %v200, %v200
        %vm204 = vcmask 1043456
        %v205 = vsel %vm204, %v200, 0.0
        %v206 = vsel %vm204, %v202, 0.0
        %v207 = vadd.f32 %v205, %v206
        %208 = vadd.xlane.f32.xlu0 %v207
        %v209 = vpop.xlane.xlu0 %208
        %v210 = vld [vmem:[#allocation5] sm:$0xf]
        %v211 = vld [vmem:[%s2] sm:$0x1]
        %v213 = vlaneseq
        %v214 = vand.u32 %v213, 127
        %v215 = vlaneseq
        %v216 = vshrl.u32 %v215, 7
        %v217 = vsub.s32 %v214, %v216
        %v218 = vrot.slane %v209, %v217
        %vm219 = vcmask 31744
        %v220 = vsel %vm219, %v218, 0
        %v223 = vsel %vm204, %v210, 0
        %225 = vmatprep.subr.mxu0 0.0
        %226 = vmatpush1.msra.mxu0 0.0
        %227 = vmatprep.subr.mxu0 0.0
        %228 = vmatpush1.msra.mxu0 0.0
        %229 = vmatprep.subr.mxu0 0.0
        %230 = vmatpush1.msra.mxu0 0.0
        %231 = vmatprep.subr.mxu0 0.0
        %232 = vmatpush1.msra.mxu0 0.0
        %233 = vmatprep.subr.mxu0 0.0
        %234 = vmatpush1.msra.mxu0 0.0
        %235 = vmatprep.subr.mxu0 0.0
        %236 = vmatpush1.msra.mxu0 0.0
        %237 = vmatprep.subr.mxu0 0.0
        %238 = vmatpush1.msra.mxu0 0.0
        %239 = vmatprep.subr.mxu0 0.0
        %240 = vmatpush1.msra.mxu0 0.0
        %241 = vmatprep.subr.mxu0 0.0
        %242 = vmatpush1.msra.mxu0 0.0
        %243 = vmatprep.subr.mxu0 0.0
        %244 = vmatpush1.msra.mxu0 0.0
        %245 = vmatprep.subr.mxu0 0.0
        %246 = vmatpush1.msra.mxu0 0.0
        %247 = vmatprep.subr.mxu0 0.0
        %248 = vmatpush1.msra.mxu0 0.0
        %249 = vmatprep.subr.mxu0 0.0
        %250 = vmatpush1.msra.mxu0 0.0
        %251 = vmatprep.subr.mxu0 0.0
        %252 = vmatpush1.msra.mxu0 0.0
        %253 = vmatprep.subr.mxu0 0.0
        %254 = vmatpush1.msra.mxu0 0.0
        %255 = vmatprep.subr.mxu0 0.0
        %256 = vmatpush1.msra.mxu0 %v223
        %257 = vmatprep.subr.mxu0 0.0
        %258 = vmatpush2.msra.mxu0 0.0
        %259 = vmatprep.subr.mxu0 0.0
        %260 = vmatpush2.msra.mxu0 0.0
        %261 = vmatprep.subr.mxu0 0.0
        %262 = vmatpush2.msra.mxu0 0.0
        %263 = vmatprep.subr.mxu0 0.0
        %264 = vmatpush2.msra.mxu0 0.0
        %265 = vmatprep.subr.mxu0 0.0
        %266 = vmatpush2.msra.mxu0 0.0
        %267 = vmatprep.subr.mxu0 0.0
        %268 = vmatpush2.msra.mxu0 0.0
        %269 = vmatprep.subr.mxu0 0.0
        %270 = vmatpush2.msra.mxu0 0.0
        %271 = vmatprep.subr.mxu0 0.0
        %272 = vmatpush2.msra.mxu0 0.0
        %273 = vmatprep.subr.mxu0 0.0
        %274 = vmatpush2.msra.mxu0 0.0
        %275 = vmatprep.subr.mxu0 0.0
        %276 = vmatpush2.msra.mxu0 0.0
        %277 = vmatprep.subr.mxu0 0.0
        %278 = vmatpush2.msra.mxu0 0.0
        %279 = vmatprep.subr.mxu0 0.0
        %280 = vmatpush2.msra.mxu0 0.0
        %281 = vmatprep.subr.mxu0 0.0
        %282 = vmatpush2.msra.mxu0 0.0
        %283 = vmatprep.subr.mxu0 0.0
        %284 = vmatpush2.msra.mxu0 0.0
        %285 = vmatprep.subr.mxu0 0.0
        %286 = vmatpush2.msra.mxu0 0.0
        %287 = vmatprep.subr.mxu0 0.0
        %288 = vmatpush2.msra.mxu0 0.0
        %289 = vmatprep.mubr.f32.mxu0 0.0
        %290 = vmatmul.mubr.f32.gmra.mxu0 %v220
        %v291 = vpop.f32.mrf.mxu0
        %v292 = vadd.f32 %v211, %v291
        %v293 = vpop.f32.mrf.mxu0
        %294 = vdwg.mxu0
        %v295 = vlaneseq
        %v296 = vshrl.u32 %v295, 7
        %v297 = vsub.s32 0, %v296
        %v298 = vrot.slane %v292, %v297
        %300 = vbcast.lane.b32.xlu0 %v298, 256
        %v301 = vpop.permute.xlu0 %300
        %v304 = vunpack.c.l.s4 839922192
        %v305 = vunpack.c.0.s8 %v304
        %v306 = vlaneseq
        %v307 = vshrl.u32 %v306, 7
        %v308 = vsub.s32 %v305, %v307
        %v309 = vrot.slane %v301, %v308
        %v311 = vmul.f32 %v200, %v309
        %312 = vst [vmem:[%s199] sm:$0xff] %v311
        %s313 = sand.u32 %s97, 1
        %s314 = scalar_lea.sflag [#allocation4], %s313
        %s315 = sand.u32 %s97, 1
        %s316 = smul.addr %s315, 8
        %s317 = scalar_lea.vmem [#allocation7], %s316
        // Predicated region
        $region41: #{tpu_custom_call.1} parent=31 // pred_check
          %p318 = pneg %p107
        $region42: #{tpu_custom_call.1} parent=31 // pred_check_branch
          %320 = sbr.rel (%p318) target = $region44
        $region43: #{tpu_custom_call.1} parent=31 // pred_region
          %s322 = ssub.s32 128, 128
          %323 = vsyncadd %s314, %s322
          %s324 = smul.addr %s21, 2
          %s325 = smul.addr %s324, 64
          %s326 = scalar_lea.hbm %s3, %s325
          %s328 = sshll.u32 %s317, 4
          %s329 = int_to_ptr.vmem [resolvable:$true] %s328
          %331 = dma.vmem_to_hbm [thread:$0]  %s329, 128, %s326, %s314
        $region44: #{tpu_custom_call.1} parent=31 // pred_fallthru
          _
      $region32: #{tpu_custom_call.1} parent=5 // pred_fallthru
        _
      %p332 = scmp.le.s32.totalorder 2, %s16
      // Predicated region
      $region45: #{tpu_custom_call.1} parent=5 // pred_check
        %p333 = pneg %p332
      $region46: #{tpu_custom_call.1} parent=5 // pred_check_branch
        %335 = sbr.rel (%p333) target = $region48
      $region47: #{tpu_custom_call.1} parent=5 // pred_region
        %s336 = ssub.s32 %s16, 2
        // Predicated region
        $region49: #{tpu_custom_call.1} parent=47 // pred_check
          %p337 = pneg %p113
        $region50: #{tpu_custom_call.1} parent=47 // pred_check_branch
          %339 = sbr.rel (%p337) target = $region52
        $region51: #{tpu_custom_call.1} parent=47 // pred_region
          %s340 = sand.u32 %s98, 1
          %s341 = scalar_lea.sflag [#allocation4], %s340
          %s342 = sand.u32 %s98, 1
          %s343 = smul.addr %s342, 8
          %s344 = scalar_lea.vmem [#allocation7], %s343
          %345 = dma.done %s341, 128
        $region52: #{tpu_custom_call.1} parent=47 // pred_fallthru
          _
      $region48: #{tpu_custom_call.1} parent=5 // pred_fallthru
        _
    $region6: #{tpu_custom_call.1} parent=1 // loop_footer
      %s20 = sadd.s32 1, %s16
    $region7: #{tpu_custom_call.1} parent=1 // loop_footer_branch
      %15 = sbr.rel target = $region3
    $region8: #{tpu_custom_call.1} parent=1 // loop_exit
      _
    %346 = vsyncpa [#allocation3], 1
    %s347 = scalar_lea.sflag [#allocation3], 1
    %348 = vsyncpa %s347, 1
    %349 = vsyncpa [#allocation6], 1
    %350 = vsyncpa [#allocation4], 1
    %s351 = scalar_lea.sflag [#allocation4], 1
    %352 = vsyncpa %s351, 1

</llo_original>
